<compile_context>
chip_gen: v7x
topology: tpu7x:2x2x1
jax: 0.10.0
libtpu: 0.0.40
codegen_flags: <defaults>
</compile_context>

<pallas_src>
import math

import jax
import jax.numpy as jnp
import numpy as np
from jax.experimental import pallas as pl
from jax.experimental.pallas import tpu as pltpu

_EPS = 1e-5


# --------------------------------------------------------------------------------------
# in-kernel helpers (trace-time; boundary masks hoisted, single compare each)
# --------------------------------------------------------------------------------------
def _shift_helpers(H, W, C):
    WC = W * C
    rows = jax.lax.broadcasted_iota(jnp.int32, (H, WC), 0)
    lane = jax.lax.broadcasted_iota(jnp.int32, (H, WC), 1)
    row_mask = {1: rows < H - 1, -1: rows >= 1}        # r + di in [0, H)
    lane_mask = {1: lane < WC - C, -1: lane >= C}      # w + dj in [0, W)

    def rshift(v, di):   # v[r + di, :], zero-padded at image-row (H) boundaries
        vr = pltpu.roll(v, (-di) % H, axis=0)
        return jnp.where(row_mask[di], vr, jnp.zeros((), v.dtype))

    def lshift(v, dj):   # v[:, lane + dj*C]  (w -> w + dj), zero-padded at W boundaries
        vr = pltpu.roll(v, (-dj * C) % WC, axis=1)
        return jnp.where(lane_mask[dj], vr, jnp.zeros((), v.dtype))

    return rshift, lshift


def _depthwise3x3(x, wdw, rshift, lshift):
    # 3x3 depthwise conv, stride 1, pad 1, on the (H, W*C) lane-dense block (VPU + XLU rolls).
    # TODO(synk): wdw rows could be loaded as sublane-broadcast reads (pl.ds(k, n, stride=0)).
    y = x * wdw[4:5, :]                                  # center tap (di=0, dj=0)
    for di in (-1, 0, 1):
        xr = x if di == 0 else rshift(x, di)
        for dj in (-1, 0, 1):
            if di == 0 and dj == 0:
                continue
            tap = xr if dj == 0 else lshift(xr, dj)
            k = (di + 1) * 3 + (dj + 1)
            y = y + tap * wdw[k:k + 1, :]
    return y


# --------------------------------------------------------------------------------------
# pass 1: accumulate per-lane sums + (W*C, W*C) second-moment gram of the depthwise output
# --------------------------------------------------------------------------------------
def _make_stats_kernel(H, W, C):
    def kernel(x_ref, wdw_ref, s1_ref, g_ref):
        @pl.when(pl.program_id(0) == 0)
        def _():
            s1_ref[...] = jnp.zeros_like(s1_ref)
            g_ref[...] = jnp.zeros_like(g_ref)

        rshift, lshift = _shift_helpers(H, W, C)
        y = _depthwise3x3(x_ref[...], wdw_ref[...], rshift, lshift)
        s1_ref[...] += jnp.sum(y, axis=0, keepdims=True)
        # y^T y over the row axis: one f32 MXU matmul per image block.
        g_ref[...] += jax.lax.dot_general(
            y, y, dimension_numbers=(((0,), (0,)), ((), ())),
            preferred_element_type=jnp.float32)
    return kernel


# --------------------------------------------------------------------------------------
# pass 2: depthwise -> BN1 affine -> pointwise -> BN2 affine + SiLU -> 3x3 conv -> residual
# --------------------------------------------------------------------------------------
def _make_apply_kernel(H, W, C):
    def kernel(x_ref, wdw_ref, sc1_ref, sh1_ref, wpw_ref, sc2_ref, sh2_ref,
               wc_ref, bc_ref, o_ref):
        rshift, lshift = _shift_helpers(H, W, C)

        # depthwise 3x3 + folded BN1 affine (VPU, f32)
        y = _depthwise3x3(x_ref[...], wdw_ref[...], rshift, lshift)
        y = y * sc1_ref[...] + sh1_ref[...]

        # pointwise 1x1: one MXU matmul against the block-diagonal (W*C, W*C) weight
        z = jnp.dot(y.astype(jnp.bfloat16), wpw_ref[...],
                    preferred_element_type=jnp.float32)

        # folded BN2 affine + SiLU
        z = z * sc2_ref[...] + sh2_ref[...]
        z = z * jax.nn.sigmoid(z)

        # final 3x3 conv: cast once to bf16, shift the packed copy, 3 banded MXU matmuls
        zb = z.astype(jnp.bfloat16)
        zm = rshift(zb, -1)
        zp = rshift(zb, 1)
        conv = jnp.dot(zm, wc_ref[0], preferred_element_type=jnp.float32)
        conv = conv + jnp.dot(zb, wc_ref[1], preferred_element_type=jnp.float32)
        conv = conv + jnp.dot(zp, wc_ref[2], preferred_element_type=jnp.float32)

        # bias + residual (re-read x so the depthwise copy is not held live)
        o_ref[...] = x_ref[...] + conv + bc_ref[...]
    return kernel


# --------------------------------------------------------------------------------------
# wrapper-side parameter prep (runs once in XLA; all tiny)
# --------------------------------------------------------------------------------------
def _lane_tile(v, W):                          # (C,) -> (1, W*C), lane = w*C + c
    return jnp.tile(v.astype(jnp.float32), (W,)).reshape(1, -1)


def _prep_weights(params, W):
    wdw, wpw, wc, bc = params["wdw"], params["wpw"], params["wc"], params["bc"]
    Cin, Cout = wdw.shape[1], wpw.shape[1]
    wdw_lane = jnp.tile(wdw.astype(jnp.float32), (1, W))                  # (9, W*Cin)

    # NOTE: the zero-padded block-diagonal / banded weights inflate MXU FLOPs by ~W; this is
    # the right trade only while W*C is a single lane (tiny C).  For C >= 128 switch the 1x1
    # to a plain (N*H*W, Cin)x(Cin, Cout) matmul and the 3x3 to un-padded dots.
    eyeW = jnp.eye(W, dtype=jnp.float32)
    wpw_block = jnp.einsum("wv,io->wivo", eyeW, wpw).reshape(W * Cin, W * Cout)

    bands = []
    for di in (-1, 0, 1):
        acc = jnp.zeros((W * Cout, W * Cout), jnp.float32)
        for dj in (-1, 0, 1):
            k = (di + 1) * 3 + (dj + 1)
            S = jnp.eye(W, k=-dj, dtype=jnp.float32)      # S[u, w] = 1 iff u == w + dj
            acc = acc + jnp.einsum("uw,ic->uiwc", S, wc[k]).reshape(W * Cout, W * Cout)
        bands.append(acc)
    wc_bands = jnp.stack(bands, axis=0).astype(jnp.bfloat16)              # (3, W*C, W*C)

    bc_lane = _lane_tile(bc, W)
    return wdw_lane, wpw_block.astype(jnp.bfloat16), wc_bands, bc_lane


def _bn_affines_from_moments(s1_lane, gram, params, N, H, W):
    """Fold BN1 to an affine; derive BN2's batch stats from y's moments (z is linear in y)."""
    Cin = params["wdw"].shape[1]
    count = float(N * H * W)
    sum_y = s1_lane.reshape(W, Cin).sum(axis=0)                           # (Cin,)
    Gw = gram.reshape(W, Cin, W, Cin)
    Gc = jnp.diagonal(Gw, axis1=0, axis2=2).sum(axis=-1)                  # (Cin, Cin)

    mean1 = sum_y / count
    Eyy = Gc / count
    # TODO(synk): E[x^2]-E[x]^2 cancels when |mean| >> std; use a shifted formulation for real data.
    var1 = jnp.diagonal(Eyy) - mean1 * mean1
    scale1 = params["g1"] * jax.lax.rsqrt(var1 + _EPS)
    shift1 = params["b1"] - mean1 * scale1

    A = scale1[:, None] * params["wpw"]                                   # (Cin, Cout)
    b = shift1 @ params["wpw"]                                            # (Cout,)
    mean2 = mean1 @ A + b
    cov = Eyy - jnp.outer(mean1, mean1)
    var2 = jnp.sum(A * (cov @ A), axis=0)
    scale2 = params["g2"] * jax.lax.rsqrt(var2 + _EPS)
    shift2 = params["b2"] - mean2 * scale2
    return scale1, shift1, scale2, shift2


# --------------------------------------------------------------------------------------
# main entry: NHWC in / NHWC out, no layout transposes around the pallas_calls
# --------------------------------------------------------------------------------------
def mbconv_block_nhwc(x_nhwc, params):
    """x_nhwc: (N, H, W, C) float32. Returns (N, H, W, C) float32 (training-mode BN)."""
    N, H, W, Cin = x_nhwc.shape
    Cout = params["wpw"].shape[1]
    assert Cin == Cout, "residual add in the reference module requires in == out channels"
    WC = W * Cin
    assert WC % 128 == 0 and H % 8 == 0, "lane-dense layout needs W*C % 128 == 0 and H % 8 == 0"
    # TODO(synk): for large H / C, grid over H-strips sized so the matmul M is a multiple of
    # 256 (v6e/v7x) / 128 (v5e), and drop the zero-padded block-diagonal/banded weights.

    x_rows = x_nhwc.reshape(N, H, WC)          # free reshape (NHWC is already contiguous so)
    wdw_lane, wpw_block, wc_bands, bc_lane = _prep_weights(params, W)

    # ---- pass 1: first/second moments of the depthwise output (reduction over images) ----
    s1, gram = pl.pallas_call(
        _make_stats_kernel(H, W, Cin),
        grid=(N,),
        in_specs=[pl.BlockSpec((None, H, WC), lambda n: (n, 0, 0)),
                  pl.BlockSpec((9, WC), lambda n: (0, 0))],
        out_specs=(pl.BlockSpec((1, WC), lambda n: (0, 0)),
                   pl.BlockSpec((WC, WC), lambda n: (0, 0))),
        out_shape=(jax.ShapeDtypeStruct((1, WC), jnp.float32),
                   jax.ShapeDtypeStruct((WC, WC), jnp.float32)),
        compiler_params=pltpu.CompilerParams(dimension_semantics=("arbitrary",)),
    )(x_rows, wdw_lane)

    scale1, shift1, scale2, shift2 = _bn_affines_from_moments(s1, gram, params, N, H, W)
    sc1, sh1 = _lane_tile(scale1, W), _lane_tile(shift1, W)
    sc2, sh2 = _lane_tile(scale2, W), _lane_tile(shift2, W)

    # ---- pass 2: apply (independent per image -> "parallel" = megacore split on v7x) ----
    flops = int(N * H * WC * (2 * WC * 4 + 40))
    bytes_accessed = int(4 * 2 * N * H * WC + 2 * 4 * WC * WC + 4 * 16 * WC)
    out_rows = pl.pallas_call(
        _make_apply_kernel(H, W, Cin),
        grid=(N,),
        in_specs=[pl.BlockSpec((None, H, WC), lambda n: (n, 0, 0)),
                  pl.BlockSpec((9, WC), lambda n: (0, 0)),
                  pl.BlockSpec((1, WC), lambda n: (0, 0)),
                  pl.BlockSpec((1, WC), lambda n: (0, 0)),
                  pl.BlockSpec((WC, WC), lambda n: (0, 0)),
                  pl.BlockSpec((1, WC), lambda n: (0, 0)),
                  pl.BlockSpec((1, WC), lambda n: (0, 0)),
                  pl.BlockSpec((3, WC, WC), lambda n: (0, 0, 0)),
                  pl.BlockSpec((1, WC), lambda n: (0, 0))],
        out_specs=pl.BlockSpec((None, H, WC), lambda n: (n, 0, 0)),
        out_shape=jax.ShapeDtypeStruct((N, H, WC), jnp.float32),
        compiler_params=pltpu.CompilerParams(dimension_semantics=("parallel",)),
        cost_estimate=pl.CostEstimate(flops=flops, transcendentals=int(N * H * WC),
                                      bytes_accessed=bytes_accessed),
    )(x_rows, wdw_lane, sc1, sh1, wpw_block, sc2, sh2, wc_bands, bc_lane)

    return out_rows.reshape(N, H, W, Cout)


# ---------------- pure-JAX f32 reference (for correctness check, NHWC) ----------------
def _bn_train(v, g, b):
    mean = jnp.mean(v, axis=(0, 1, 2), keepdims=True)
    var = jnp.mean((v - mean) ** 2, axis=(0, 1, 2), keepdims=True)
    return (v - mean) * jax.lax.rsqrt(var + _EPS) * g.reshape(1, 1, 1, -1) + b.reshape(1, 1, 1, -1)


def mbconv_reference_nhwc(x, p):
    dn = ("NHWC", "HWIO", "NHWC")
    Cin = x.shape[-1]
    Cout = p["wpw"].shape[1]
    w_dw = p["wdw"].reshape(3, 3, Cin)[:, :, None, :]                     # (3,3,1,Cin)
    y = jax.lax.conv_general_dilated(x, w_dw, (1, 1), ((1, 1), (1, 1)),
                                     dimension_numbers=dn, feature_group_count=Cin)
    y = _bn_train(y, p["g1"], p["b1"])
    z = jax.lax.conv_general_dilated(y, p["wpw"][None, None], (1, 1), ((0, 0), (0, 0)),
                                     dimension_numbers=dn)
    z = _bn_train(z, p["g2"], p["b2"])
    z = z * jax.nn.sigmoid(z)
    w_c = p["wc"].reshape(3, 3, Cout, Cout)
    o = jax.lax.conv_general_dilated(z, w_c, (1, 1), ((1, 1), (1, 1)),
                                     dimension_numbers=dn)
    return x + o + p["bc"].reshape(1, 1, 1, Cout)


if __name__ == "__main__":
    N, H, W = 2, 16, 16
    Cin = Cout = 8   # residual requires in == out channels; W*C = 128 = one full lane width

    key = jax.random.PRNGKey(0)
    k0, k1, k2, k3, k4 = jax.random.split(key, 5)

    params = {
        "wdw": jax.random.normal(k0, (9, Cin), jnp.float32) * (1.0 / 3.0),
        "g1": jnp.ones((Cin,), jnp.float32),
        "b1": jnp.zeros((Cin,), jnp.float32),
        "wpw": jax.random.normal(k1, (Cin, Cout), jnp.float32) / math.sqrt(Cin),
        "g2": jnp.ones((Cout,), jnp.float32),
        "b2": jnp.zeros((Cout,), jnp.float32),
        "wc": jax.random.normal(k2, (9, Cout, Cout), jnp.float32) / math.sqrt(9 * Cout),
        "bc": jax.random.normal(k3, (Cout,), jnp.float32) * 0.1,
    }
    # TODO(synk): training-mode BatchNorm running-stats (running_mean/var) buffer updates are a
    # module side effect not reproduced here; they do not affect the forward output.

    # Module-facing input is PyTorch NCHW; the kernel path is NHWC / lane-dense end-to-end
    # (no transposes around the pallas_calls).  The single transpose below only adapts the
    # PyTorch-layout test input; a real NHWC pipeline would skip it entirely.
    x_nchw = jax.random.normal(k4, (N, Cin, H, W), jnp.float32)
    x_nhwc = jnp.transpose(x_nchw, (0, 2, 3, 1))

    out = jax.block_until_ready(mbconv_block_nhwc(x_nhwc, params))
    ref = jax.block_until_ready(mbconv_reference_nhwc(x_nhwc, params))

    # bf16 MXU operands (f32 accumulation) + analytically folded BN2 vs. the all-f32 reference
    np.testing.assert_allclose(np.asarray(out), np.asarray(ref), atol=4e-2, rtol=4e-2)
    print("KERNEL_OK")
</pallas_src>

<mosaic_0001>
module attributes {stable_mosaic.version = 11 : i64} {
  func.func @kernel(%arg0: i32, %arg1: memref<1x16x128xf32, #tpu.memory_space<vmem>>, %arg2: memref<9x128xf32, #tpu.memory_space<vmem>>, %arg3: memref<1x128xf32, #tpu.memory_space<vmem>>, %arg4: memref<128x128xf32, #tpu.memory_space<vmem>>) attributes {dimension_semantics = [#tpu.dimension_semantics<arbitrary>], iteration_bounds = array<i64: 2>, scalar_prefetch = 0 : i64, scratch_operands = 0 : i64, tpu.core_type = #tpu.core_type<tc>, window_params = [{transform_indices = @transform_0, window_bounds = array<i64: 1, 16, 128>}, {pipeline_mode = #tpu.pipeline_mode<synchronous>, transform_indices = @transform_1, window_bounds = array<i64: 9, 128>}, {pipeline_mode = #tpu.pipeline_mode<synchronous>, transform_indices = @transform_2, window_bounds = array<i64: 1, 128>}, {pipeline_mode = #tpu.pipeline_mode<synchronous>, transform_indices = @transform_3, window_bounds = array<i64: 128, 128>}]} {
    %c0_i32 = arith.constant 0 : i32
    %0 = arith.cmpi eq, %arg0, %c0_i32 : i32
    %1 = arith.extui %0 : i1 to i32
    %c0_i32_0 = arith.constant 0 : i32
    %2 = arith.cmpi ne, %1, %c0_i32_0 : i32
    scf.if %2 {
      %cst_30 = arith.constant 0.000000e+00 : f32
      %84 = vector.broadcast %cst_30 : f32 to vector<1x128xf32>
      %c0_31 = arith.constant 0 : index
      %c0_32 = arith.constant 0 : index
      %85 = vector.load %arg3[%c0_31, %c0_32] : memref<1x128xf32, #tpu.memory_space<vmem>>, vector<1x128xf32>
      tpu.vector_store %arg3[%c0_31, %c0_32], %84 {strides = array<i32>} : memref<1x128xf32, #tpu.memory_space<vmem>>, vector<1x128xf32>,
      %cst_33 = arith.constant 0.000000e+00 : f32
      %86 = vector.broadcast %cst_33 : f32 to vector<128x128xf32>
      %c0_34 = arith.constant 0 : index
      %c0_35 = arith.constant 0 : index
      %87 = vector.load %arg4[%c0_34, %c0_35] : memref<128x128xf32, #tpu.memory_space<vmem>>, vector<128x128xf32>
      tpu.vector_store %arg4[%c0_34, %c0_35], %86 {strides = array<i32>} : memref<128x128xf32, #tpu.memory_space<vmem>>, vector<128x128xf32>,
    } else {
    }
    %3 = tpu.iota {dimensions = array<i32: 0>} : vector<16x128xi32>
    %4 = tpu.iota {dimensions = array<i32: 1>} : vector<16x128xi32>
    %c15_i32 = arith.constant 15 : i32
    %5 = vector.broadcast %c15_i32 : i32 to vector<16x128xi32>
    %6 = arith.cmpi slt, %3, %5 : vector<16x128xi32>
    %c1_i32 = arith.constant 1 : i32
    %7 = vector.broadcast %c1_i32 : i32 to vector<16x128xi32>
    %8 = arith.cmpi sge, %3, %7 : vector<16x128xi32>
    %c120_i32 = arith.constant 120 : i32
    %9 = vector.broadcast %c120_i32 : i32 to vector<16x128xi32>
    %10 = arith.cmpi slt, %4, %9 : vector<16x128xi32>
    %c8_i32 = arith.constant 8 : i32
    %11 = vector.broadcast %c8_i32 : i32 to vector<16x128xi32>
    %12 = arith.cmpi sge, %4, %11 : vector<16x128xi32>
    %c0 = arith.constant 0 : index
    %c0_1 = arith.constant 0 : index
    %c0_2 = arith.constant 0 : index
    %13 = vector.load %arg1[%c0, %c0_1, %c0_2] : memref<1x16x128xf32, #tpu.memory_space<vmem>>, vector<1x16x128xf32>
    %14 = vector.shape_cast %13 : vector<1x16x128xf32> to vector<16x128xf32>
    %c0_3 = arith.constant 0 : index
    %c0_4 = arith.constant 0 : index
    %15 = vector.load %arg2[%c0_3, %c0_4] : memref<9x128xf32, #tpu.memory_space<vmem>>, vector<9x128xf32>
    %16 = vector.extract_strided_slice %15 {offsets = [4, 0], sizes = [1, 128], strides = [1, 1]} : vector<9x128xf32> to vector<1x128xf32>
    %17 = vector.broadcast %16 : vector<1x128xf32> to vector<16x128xf32>
    %18 = arith.mulf %14, %17 : vector<16x128xf32>
    %c1_i32_5 = arith.constant 1 : i32
    %19 = tpu.dynamic_rotate %14 by %c1_i32_5 dim 0 : vector<16x128xf32>, i32 -> vector<16x128xf32>
    %cst = arith.constant 0.000000e+00 : f32
    %20 = vector.broadcast %cst : f32 to vector<16x128xf32>
    %21 = arith.select %8, %19, %20 : vector<16x128xi1>, vector<16x128xf32>
    %c8_i32_6 = arith.constant 8 : i32
    %22 = tpu.dynamic_rotate %21 by %c8_i32_6 dim 1 : vector<16x128xf32>, i32 -> vector<16x128xf32>
    %cst_7 = arith.constant 0.000000e+00 : f32
    %23 = vector.broadcast %cst_7 : f32 to vector<16x128xf32>
    %24 = arith.select %12, %22, %23 : vector<16x128xi1>, vector<16x128xf32>
    %25 = vector.extract_strided_slice %15 {offsets = [0, 0], sizes = [1, 128], strides = [1, 1]} : vector<9x128xf32> to vector<1x128xf32>
    %26 = vector.broadcast %25 : vector<1x128xf32> to vector<16x128xf32>
    %27 = arith.mulf %24, %26 : vector<16x128xf32>
    %28 = arith.addf %18, %27 : vector<16x128xf32>
    %29 = vector.extract_strided_slice %15 {offsets = [1, 0], sizes = [1, 128], strides = [1, 1]} : vector<9x128xf32> to vector<1x128xf32>
    %30 = vector.broadcast %29 : vector<1x128xf32> to vector<16x128xf32>
    %31 = arith.mulf %21, %30 : vector<16x128xf32>
    %32 = arith.addf %28, %31 : vector<16x128xf32>
    %c120_i32_8 = arith.constant 120 : i32
    %33 = tpu.dynamic_rotate %21 by %c120_i32_8 dim 1 : vector<16x128xf32>, i32 -> vector<16x128xf32>
    %cst_9 = arith.constant 0.000000e+00 : f32
    %34 = vector.broadcast %cst_9 : f32 to vector<16x128xf32>
    %35 = arith.select %10, %33, %34 : vector<16x128xi1>, vector<16x128xf32>
    %36 = vector.extract_strided_slice %15 {offsets = [2, 0], sizes = [1, 128], strides = [1, 1]} : vector<9x128xf32> to vector<1x128xf32>
    %37 = vector.broadcast %36 : vector<1x128xf32> to vector<16x128xf32>
    %38 = arith.mulf %35, %37 : vector<16x128xf32>
    %39 = arith.addf %32, %38 : vector<16x128xf32>
    %c8_i32_10 = arith.constant 8 : i32
    %40 = tpu.dynamic_rotate %14 by %c8_i32_10 dim 1 : vector<16x128xf32>, i32 -> vector<16x128xf32>
    %cst_11 = arith.constant 0.000000e+00 : f32
    %41 = vector.broadcast %cst_11 : f32 to vector<16x128xf32>
    %42 = arith.select %12, %40, %41 : vector<16x128xi1>, vector<16x128xf32>
    %43 = vector.extract_strided_slice %15 {offsets = [3, 0], sizes = [1, 128], strides = [1, 1]} : vector<9x128xf32> to vector<1x128xf32>
    %44 = vector.broadcast %43 : vector<1x128xf32> to vector<16x128xf32>
    %45 = arith.mulf %42, %44 : vector<16x128xf32>
    %46 = arith.addf %39, %45 : vector<16x128xf32>
    %c120_i32_12 = arith.constant 120 : i32
    %47 = tpu.dynamic_rotate %14 by %c120_i32_12 dim 1 : vector<16x128xf32>, i32 -> vector<16x128xf32>
    %cst_13 = arith.constant 0.000000e+00 : f32
    %48 = vector.broadcast %cst_13 : f32 to vector<16x128xf32>
    %49 = arith.select %10, %47, %48 : vector<16x128xi1>, vector<16x128xf32>
    %50 = vector.extract_strided_slice %15 {offsets = [5, 0], sizes = [1, 128], strides = [1, 1]} : vector<9x128xf32> to vector<1x128xf32>
    %51 = vector.broadcast %50 : vector<1x128xf32> to vector<16x128xf32>
    %52 = arith.mulf %49, %51 : vector<16x128xf32>
    %53 = arith.addf %46, %52 : vector<16x128xf32>
    %c15_i32_14 = arith.constant 15 : i32
    %54 = tpu.dynamic_rotate %14 by %c15_i32_14 dim 0 : vector<16x128xf32>, i32 -> vector<16x128xf32>
    %cst_15 = arith.constant 0.000000e+00 : f32
    %55 = vector.broadcast %cst_15 : f32 to vector<16x128xf32>
    %56 = arith.select %6, %54, %55 : vector<16x128xi1>, vector<16x128xf32>
    %c8_i32_16 = arith.constant 8 : i32
    %57 = tpu.dynamic_rotate %56 by %c8_i32_16 dim 1 : vector<16x128xf32>, i32 -> vector<16x128xf32>
    %cst_17 = arith.constant 0.000000e+00 : f32
    %58 = vector.broadcast %cst_17 : f32 to vector<16x128xf32>
    %59 = arith.select %12, %57, %58 : vector<16x128xi1>, vector<16x128xf32>
    %60 = vector.extract_strided_slice %15 {offsets = [6, 0], sizes = [1, 128], strides = [1, 1]} : vector<9x128xf32> to vector<1x128xf32>
    %61 = vector.broadcast %60 : vector<1x128xf32> to vector<16x128xf32>
    %62 = arith.mulf %59, %61 : vector<16x128xf32>
    %63 = arith.addf %53, %62 : vector<16x128xf32>
    %64 = vector.extract_strided_slice %15 {offsets = [7, 0], sizes = [1, 128], strides = [1, 1]} : vector<9x128xf32> to vector<1x128xf32>
    %65 = vector.broadcast %64 : vector<1x128xf32> to vector<16x128xf32>
    %66 = arith.mulf %56, %65 : vector<16x128xf32>
    %67 = arith.addf %63, %66 : vector<16x128xf32>
    %c120_i32_18 = arith.constant 120 : i32
    %68 = tpu.dynamic_rotate %56 by %c120_i32_18 dim 1 : vector<16x128xf32>, i32 -> vector<16x128xf32>
    %cst_19 = arith.constant 0.000000e+00 : f32
    %69 = vector.broadcast %cst_19 : f32 to vector<16x128xf32>
    %70 = arith.select %10, %68, %69 : vector<16x128xi1>, vector<16x128xf32>
    %71 = vector.extract_strided_slice %15 {offsets = [8, 0], sizes = [1, 128], strides = [1, 1]} : vector<9x128xf32> to vector<1x128xf32>
    %72 = vector.broadcast %71 : vector<1x128xf32> to vector<16x128xf32>
    %73 = arith.mulf %70, %72 : vector<16x128xf32>
    %74 = arith.addf %67, %73 : vector<16x128xf32>
    %c0_20 = arith.constant 0 : index
    %c0_21 = arith.constant 0 : index
    %75 = vector.load %arg3[%c0_20, %c0_21] : memref<1x128xf32, #tpu.memory_space<vmem>>, vector<1x128xf32>
    %cst_22 = arith.constant dense<0.000000e+00> : vector<128xf32>
    %76 = vector.multi_reduction <add>, %74, %cst_22 [0] : vector<16x128xf32> to vector<128xf32>
    %77 = vector.shape_cast %76 : vector<128xf32> to vector<1x128xf32>
    %78 = arith.addf %75, %77 : vector<1x128xf32>
    %c0_23 = arith.constant 0 : index
    %c0_24 = arith.constant 0 : index
    %79 = vector.load %arg3[%c0_23, %c0_24] : memref<1x128xf32, #tpu.memory_space<vmem>>, vector<1x128xf32>
    tpu.vector_store %arg3[%c0_23, %c0_24], %78 {strides = array<i32>} : memref<1x128xf32, #tpu.memory_space<vmem>>, vector<1x128xf32>,
    %c0_25 = arith.constant 0 : index
    %c0_26 = arith.constant 0 : index
    %80 = vector.load %arg4[%c0_25, %c0_26] : memref<128x128xf32, #tpu.memory_space<vmem>>, vector<128x128xf32>
    %cst_27 = arith.constant dense<0.000000e+00> : vector<128x128xf32>
    %81 = tpu.matmul %74, %74, %cst_27 {dimension_numbers = #tpu.dot_dimension_numbers<[0], [0], [1], [1], [0, 1, 1, 1], [], []>} : vector<16x128xf32>, vector<16x128xf32>, vector<128x128xf32> -> vector<128x128xf32>
    %82 = arith.addf %80, %81 : vector<128x128xf32>
    %c0_28 = arith.constant 0 : index
    %c0_29 = arith.constant 0 : index
    %83 = vector.load %arg4[%c0_28, %c0_29] : memref<128x128xf32, #tpu.memory_space<vmem>>, vector<128x128xf32>
    tpu.vector_store %arg4[%c0_28, %c0_29], %82 {strides = array<i32>} : memref<128x128xf32, #tpu.memory_space<vmem>>, vector<128x128xf32>,
    return
  }
  func.func @transform_0(%arg0: i32) -> (i32, i32, i32) {
    %c0_i32 = arith.constant 0 : i32
    %c0_i32_0 = arith.constant 0 : i32
    %c0_i32_1 = arith.constant 0 : i32
    return %arg0, %c0_i32, %c0_i32_0 : i32, i32, i32
  }
  func.func @transform_1(%arg0: i32) -> (i32, i32) {
    %c0_i32 = arith.constant 0 : i32
    %c0_i32_0 = arith.constant 0 : i32
    %c0_i32_1 = arith.constant 0 : i32
    return %c0_i32, %c0_i32_0 : i32, i32
  }
  func.func @transform_2(%arg0: i32) -> (i32, i32) {
    %c0_i32 = arith.constant 0 : i32
    %c0_i32_0 = arith.constant 0 : i32
    %c0_i32_1 = arith.constant 0 : i32
    return %c0_i32, %c0_i32_0 : i32, i32
  }
  func.func @transform_3(%arg0: i32) -> (i32, i32) {
    %c0_i32 = arith.constant 0 : i32
    %c0_i32_0 = arith.constant 0 : i32
    %c0_i32_1 = arith.constant 0 : i32
    return %c0_i32, %c0_i32_0 : i32, i32
  }
}

</mosaic_0001>

<llo_original>
// kernel: tpu_custom_call.1
$region0: #{tpu_custom_call.1}
  #allocation0 [shape = 'u32[]', space=smem, size = 0x4, offset = 0x4, fixed_abs, tag = 'smem constant byte address 0x4 - core index']
  #allocation1 [shape = 'u32[144,128]{1,0:T(1,128)}', space=vmem, size = 0x12000, scoped, tag = 'internal scratch']
  %s0 = inlined_call_operand.hbm [shape: f32[2,16,128], index: 0, kind: input, shape index: {}]
  %s1 = inlined_call_operand.hbm [shape: f32[9,128], index: 1, kind: input, shape index: {}]
  %s2 = inlined_call_operand.hbm [shape: f32[1,128], index: 2, kind: output, shape index: {0}]
  %s3 = inlined_call_operand.hbm [shape: f32[128,128], index: 3, kind: output, shape index: {1}]
  %4 = xla_tuple %s2, %s3
  %s5 = sld [smem:[#allocation0]]
  $region61: #{tpu_custom_call.1} parent=0
    _
  %s7 = ssub.s32 1, %s5
  %s8 = scalar_select 0, %s7, %s5
  $region1: #{tpu_custom_call.1} parent=0
    #allocation2 [shape = 'u8[16384]{0}', space=vmem, size = 0x4000, scoped, tag = 'input window, operand 0']
    #allocation3 [shape = 's32[2]{0}', space=sflag, size = 0x8, scoped, tag = 'scoped memory for tpu_custom_call.1']
    #allocation4 [shape = 's32[2]{0}', space=sflag, size = 0x8, scoped, tag = 'scoped memory for tpu_custom_call.1']
    #allocation5 [shape = 'u8[8192]{0}', space=vmem, size = 0x2000, scoped, tag = 'input window, operand 1, single buffered']
    #allocation6 [shape = 's32[1]{0}', space=sflag, size = 0x4, scoped, tag = 'scoped memory for tpu_custom_call.1']
    #allocation7 [shape = 'u8[512]{0}', space=vmem, size = 0x400, scoped, tag = 'output window, operand 0, single buffered']
    #allocation8 [shape = 'u8[65536]{0}', space=vmem, size = 0x10000, scoped, tag = 'output window, operand 1, single buffered']
    #allocation9 [shape = 's32[1]{0}', space=sflag, size = 0x4, scoped, tag = 'scoped memory for tpu_custom_call.1']
    %9 = vsyncpa [#allocation3], 0
    %s10 = scalar_lea.sflag [#allocation3], 1
    %11 = vsyncpa %s10, 0
    %12 = vsyncpa [#allocation6], 0
    %13 = vsyncpa [#allocation4], 0
    %14 = vsyncpa [#allocation9], 0
    loop: start=0, step=1, limit=4
    $region2: #{tpu_custom_call.1} parent=1 // loop_pre_header
      _
    $region3: #{tpu_custom_call.1} parent=1 // loop_header
      %s16 = sphi 0, %s20
      %p17 = scmp.ge.s32.totalorder %s16, 4
      %s26 = sphi 0, %s28
      %s29 = sphi 0, %s26
      %s30 = sphi 0, %s29
      %s46 = sphi 0, %s30
      %s50 = sphi 0, %s50
      %s52 = sphi 0, %s50
      %s53 = sphi 0, %s52
      %s67 = sphi 0, %s53
      %s71 = sphi 0, %s71
      %s73 = sphi 0, %s71
      %s74 = sphi 0, %s73
      %s88 = sphi 0, %s74
      %s92 = sphi 0, %s92
      %s94 = sphi 0, %s92
      %s95 = sphi 0, %s94
      %s109 = sphi 0, %s95
    $region4: #{tpu_custom_call.1} parent=1 // loop_header_branch
      %19 = sbr.rel (%p17) target = $region8
    $region5: #{tpu_custom_call.1} parent=1 // loop_body
      %s21 = ssub.s32 %s16, 1
      %s22 = ssub.s32 %s16, 2
      %s23 = sadd.s32 %s16, 1
      %s24 = ssub.s32 %s16, %s23
      %p25 = scmp.eq.s32.totalorder %s24, 0
      %s27 = sadd.s32 %s26, 1
      %s28 = scalar_select %p25, %s26, %s27
      %p31 = pneg %p25
      %p32 = scmp.eq.s32.totalorder %s16, 1
      %p33 = por %p31, %p32
      %p34 = scmp.ne.s32.totalorder %s26, %s29
      %p35 = scmp.eq.s32.totalorder %s16, 0
      %p36 = por %p34, %p35
      %p37 = scmp.ne.s32.totalorder %s26, %s29
      %p38 = scmp.eq.s32.totalorder %s21, 1
      %p39 = por %p37, %p38
      %p40 = scmp.ne.s32.totalorder %s29, %s30
      %p41 = scmp.eq.s32.totalorder %s21, 0
      %p42 = por %p40, %p41
      %p43 = scmp.ne.s32.totalorder %s29, %s30
      %p44 = scmp.eq.s32.totalorder %s22, 1
      %p45 = por %p43, %p44
      %p47 = scmp.ne.s32.totalorder %s30, %s46
      %p48 = scmp.eq.s32.totalorder %s22, 0
      %p49 = por %p47, %p48
      %s51 = sadd.s32 %s50, 1
      %p54 = scmp.eq.s32.totalorder %s16, 1
      %p55 = scmp.ne.s32.totalorder %s50, %s52
      %p56 = scmp.eq.s32.totalorder %s16, 0
      %p57 = por %p55, %p56
      %p58 = scmp.ne.s32.totalorder %s50, %s52
      %p59 = scmp.eq.s32.totalorder %s21, 1
      %p60 = por %p58, %p59
      %p61 = scmp.ne.s32.totalorder %s52, %s53
      %p62 = scmp.eq.s32.totalorder %s21, 0
      %p63 = por %p61, %p62
      %p64 = scmp.ne.s32.totalorder %s52, %s53
      %p65 = scmp.eq.s32.totalorder %s22, 1
      %p66 = por %p64, %p65
      %p68 = scmp.ne.s32.totalorder %s53, %s67
      %p69 = scmp.eq.s32.totalorder %s22, 0
      %p70 = por %p68, %p69
      %s72 = sadd.s32 %s71, 1
      %p75 = scmp.eq.s32.totalorder %s16, 1
      %p76 = scmp.ne.s32.totalorder %s71, %s73
      %p77 = scmp.eq.s32.totalorder %s16, 0
      %p78 = por %p76, %p77
      %p79 = scmp.ne.s32.totalorder %s71, %s73
      %p80 = scmp.eq.s32.totalorder %s21, 1
      %p81 = por %p79, %p80
      %p82 = scmp.ne.s32.totalorder %s73, %s74
      %p83 = scmp.eq.s32.totalorder %s21, 0
      %p84 = por %p82, %p83
      %p85 = scmp.ne.s32.totalorder %s73, %s74
      %p86 = scmp.eq.s32.totalorder %s22, 1
      %p87 = por %p85, %p86
      %p89 = scmp.ne.s32.totalorder %s74, %s88
      %p90 = scmp.eq.s32.totalorder %s22, 0
      %p91 = por %p89, %p90
      %s93 = sadd.s32 %s92, 1
      %p96 = scmp.eq.s32.totalorder %s16, 1
      %p97 = scmp.ne.s32.totalorder %s92, %s94
      %p98 = scmp.eq.s32.totalorder %s16, 0
      %p99 = por %p97, %p98
      %p100 = scmp.ne.s32.totalorder %s92, %s94
      %p101 = scmp.eq.s32.totalorder %s21, 1
      %p102 = por %p100, %p101
      %p103 = scmp.ne.s32.totalorder %s94, %s95
      %p104 = scmp.eq.s32.totalorder %s21, 0
      %p105 = por %p103, %p104
      %p106 = scmp.ne.s32.totalorder %s94, %s95
      %p107 = scmp.eq.s32.totalorder %s22, 1
      %p108 = por %p106, %p107
      %p110 = scmp.ne.s32.totalorder %s95, %s109
      %p111 = scmp.eq.s32.totalorder %s22, 0
      %p112 = por %p110, %p111
      %p113 = scmp.le.s32.totalorder 1, %s16
      %p114 = scmp.lt.s32.totalorder %s16, 3
      %p115 = pnand %p113, %p114
      %p116 = pneg %p115
      // Predicated region
      $region9: #{tpu_custom_call.1} parent=5 // pred_check
        _
      $region10: #{tpu_custom_call.1} parent=5 // pred_check_branch
        %118 = sbr.rel (%p115) target = $region12
      $region11: #{tpu_custom_call.1} parent=5 // pred_region
        %s119 = ssub.s32 %s16, 1
        // Predicated region
        $region13: #{tpu_custom_call.1} parent=11 // pred_check
          %p120 = pneg %p63
        $region14: #{tpu_custom_call.1} parent=11 // pred_check_branch
          %122 = sbr.rel (%p120) target = $region16
        $region15: #{tpu_custom_call.1} parent=11 // pred_region
          %s124 = ssub.s32 256, 256
          %125 = vsyncadd [#allocation6], %s124
          %s126 = sshll.u32 [#allocation5], 4
          %s127 = int_to_ptr.vmem [resolvable:$true] %s126
          %132 = dma.hbm_to_vmem [thread:$0]  %s1, 256, %s127, [#allocation6], 128, 128, 8
        $region16: #{tpu_custom_call.1} parent=11 // pred_fallthru
          _
      $region12: #{tpu_custom_call.1} parent=5 // pred_fallthru
        _
      %p133 = scmp.lt.s32.totalorder %s16, 2
      // Predicated region
      $region17: #{tpu_custom_call.1} parent=5 // pred_check
        %p134 = pneg %p133
      $region18: #{tpu_custom_call.1} parent=5 // pred_check_branch
        %136 = sbr.rel (%p134) target = $region20
      $region19: #{tpu_custom_call.1} parent=5 // pred_region
        // Predicated region
        $region21: #{tpu_custom_call.1} parent=19 // pred_check
          %p137 = pneg %p36
        $region22: #{tpu_custom_call.1} parent=19 // pred_check_branch
          %139 = sbr.rel (%p137) target = $region24
        $region23: #{tpu_custom_call.1} parent=19 // pred_region
          %s140 = sand.u32 %s26, 1
          %s141 = scalar_lea.sflag [#allocation3], %s140
          %s142 = sand.u32 %s26, 1
          %s143 = smul.addr %s142, 16
          %s144 = scalar_lea.vmem [#allocation2], %s143
          %s146 = ssub.s32 256, 256
          %147 = vsyncadd %s141, %s146
          %s148 = smul.addr %s16, 2
          %s149 = smul.addr %s148, 128
          %s150 = scalar_lea.hbm %s0, %s149
          %s151 = sshll.u32 %s144, 4
          %s152 = int_to_ptr.vmem [resolvable:$true] %s151
          %157 = dma.hbm_to_vmem [thread:$0]  %s150, 256, %s152, %s141, 128, 128, 8
        $region24: #{tpu_custom_call.1} parent=19 // pred_fallthru
          _
      $region20: #{tpu_custom_call.1} parent=5 // pred_fallthru
        _
      %p158 = scmp.le.s32.totalorder 1, %s16
      %p159 = scmp.lt.s32.totalorder %s16, 3
      %p160 = pnand %p158, %p159
      %p161 = pneg %p160
      // Predicated region
      $region25: #{tpu_custom_call.1} parent=5 // pred_check
        _
      $region26: #{tpu_custom_call.1} parent=5 // pred_check_branch
        %163 = sbr.rel (%p160) target = $region28
      $region27: #{tpu_custom_call.1} parent=5 // pred_region
        %s164 = ssub.s32 %s16, 1
        %s165 = sand.u32 %s29, 1
        %s166 = scalar_lea.sflag [#allocation3], %s165
        %s167 = sand.u32 %s29, 1
        %s168 = smul.addr %s167, 16
        %s169 = scalar_lea.vmem [#allocation2], %s168
        // Predicated region
        $region29: #{tpu_custom_call.1} parent=27 // pred_check
          %p170 = pneg %p42
        $region30: #{tpu_custom_call.1} parent=27 // pred_check_branch
          %172 = sbr.rel (%p170) target = $region32
        $region31: #{tpu_custom_call.1} parent=27 // pred_region
          %173 = dma.done %s166, 256
        $region32: #{tpu_custom_call.1} parent=27 // pred_fallthru
          _
        // Predicated region
        $region33: #{tpu_custom_call.1} parent=27 // pred_check
          %p174 = pneg %p63
        $region34: #{tpu_custom_call.1} parent=27 // pred_check_branch
          %176 = sbr.rel (%p174) target = $region36
        $region35: #{tpu_custom_call.1} parent=27 // pred_region
          %177 = dma.done [#allocation6], 256
        $region36: #{tpu_custom_call.1} parent=27 // pred_fallthru
          _
        %s178 = sand.u32 %s29, 1
        %s179 = scalar_lea.sflag [#allocation3], %s178
        %s180 = sand.u32 %s29, 1
        %s181 = smul.addr %s180, 16
        %s182 = scalar_lea.vmem [#allocation2], %s181
        %p183 = pneg %p42
        %p184 = pneg %p39
        %p185 = pneg %p63
        %p186 = pneg %p60
        %p187 = pneg %p84
        %p188 = pneg %p81
        %p189 = pneg %p105
        %p190 = pneg %p102
        %p191 = scmp.eq.s32.totalorder %s21, 0
        // Predicated region
        $region37: #{tpu_custom_call.1} parent=27 // pred_check
          %p192 = pneg %p191
        $region38: #{tpu_custom_call.1} parent=27 // pred_check_branch
          %194 = sbr.rel (%p192) target = $region40
        $region39: #{tpu_custom_call.1} parent=27 // pred_region
          %195 = vst [vmem:[#allocation7] sm:$0x1] 0.0
          %196 = vst [vmem:[#allocation8] sm:$0xff] 0.0
          %197 = vst [vmem:[#allocation8 + $0x8] sm:$0xff] 0.0
          %198 = vst [vmem:[#allocation8 + $0x10] sm:$0xff] 0.0
          %199 = vst [vmem:[#allocation8 + $0x18] sm:$0xff] 0.0
          %200 = vst [vmem:[#allocation8 + $0x20] sm:$0xff] 0.0
          %201 = vst [vmem:[#allocation8 + $0x28] sm:$0xff] 0.0
          %202 = vst [vmem:[#allocation8 + $0x30] sm:$0xff] 0.0
          %203 = vst [vmem:[#allocation8 + $0x38] sm:$0xff] 0.0
          %204 = vst [vmem:[#allocation8 + $0x40] sm:$0xff] 0.0
          %205 = vst [vmem:[#allocation8 + $0x48] sm:$0xff] 0.0
          %206 = vst [vmem:[#allocation8 + $0x50] sm:$0xff] 0.0
          %207 = vst [vmem:[#allocation8 + $0x58] sm:$0xff] 0.0
          %208 = vst [vmem:[#allocation8 + $0x60] sm:$0xff] 0.0
          %209 = vst [vmem:[#allocation8 + $0x68] sm:$0xff] 0.0
          %210 = vst [vmem:[#allocation8 + $0x70] sm:$0xff] 0.0
          %211 = vst [vmem:[#allocation8 + $0x78] sm:$0xff] 0.0
        $region40: #{tpu_custom_call.1} parent=27 // pred_fallthru
          _
        %v212 = vlaneseq
        %v213 = vshrl.u32 %v212, 7
        %v214 = vadd.s32 %v213, 8
        %v215 = vlaneseq
        %v216 = vand.u32 %v215, 127
        %vm217 = vcmp.lt.s32.totalorder %v213, 15
        %vm218 = vcmp.lt.s32.totalorder %v214, 15
        %vm219 = vcmp.ge.s32.totalorder %v213, 1
        %vm220 = vcmp.ge.s32.totalorder %v214, 1
        %vm221 = vcmp.lt.s32.totalorder %v216, 120
        %vm222 = vcmp.ge.s32.totalorder %v216, 8
        %v223 = vld [vmem:[%s169] sm:$0xff]
        %v224 = vld [vmem:[%s169 + $0x8] sm:$0xff]
        %v225 = vld [vmem:[#allocation5] sm:$0xff]
        %v226 = vld [vmem:[#allocation5 + $0x8] sm:$0x1]
        %v227 = vlaneseq
        %v228 = vshrl.u32 %v227, 7
        %v229 = vsub.s32 4, %v228
        %v230 = vrot.slane %v225, %v229
        %v231 = vmul.f32 %v223, %v230
        %v232 = vmul.f32 %v224, %v230
        %v233 = vrot.slane %v223, 7
        %v234 = vrot.slane %v224, 7
        %vm235 = vcmp.lt.s32.totalorder %v213, 1
        %v236 = vsel %vm235, %v233, %v234
        %v237 = vsel %vm235, %v234, %v233
        %v238 = vsel %vm219, %v237, 0.0
        %v239 = vsel %vm220, %v236, 0.0
        %240 = vrot.lane.b32.xlu0 %v238, 8
        %v241 = vpop.permute.xlu0 %240
        %242 = vrot.lane.b32.xlu0 %v239, 8
        %v243 = vpop.permute.xlu0 %242
        %v244 = vsel %vm222, %v241, 0.0
        %v245 = vsel %vm222, %v243, 0.0
        %v246 = vlaneseq
        %v247 = vshrl.u32 %v246, 7
        %v248 = vsub.s32 0, %v247
        %v249 = vrot.slane %v225, %v248
        %v250 = vmul.f32 %v244, %v249
        %v251 = vmul.f32 %v245, %v249
        %v252 = vadd.f32 %v231, %v250
        %v253 = vadd.f32 %v232, %v251
        %v254 = vlaneseq
        %v255 = vshrl.u32 %v254, 7
        %v256 = vsub.s32 1, %v255
        %v257 = vrot.slane %v225, %v256
        %v258 = vmul.f32 %v238, %v257
        %v259 = vmul.f32 %v239, %v257
        %v260 = vadd.f32 %v252, %v258
        %v261 = vadd.f32 %v253, %v259
        %262 = vrot.lane.b32.xlu0 %v238, 120
        %v263 = vpop.permute.xlu0 %262
        %264 = vrot.lane.b32.xlu0 %v239, 120
        %v265 = vpop.permute.xlu0 %264
        %v266 = vsel %vm221, %v263, 0.0
        %v267 = vsel %vm221, %v265, 0.0
        %v268 = vlaneseq
        %v269 = vshrl.u32 %v268, 7
        %v270 = vsub.s32 2, %v269
        %v271 = vrot.slane %v225, %v270
        %v272 = vmul.f32 %v266, %v271
        %v273 = vmul.f32 %v267, %v271
        %v274 = vadd.f32 %v260, %v272
        %v275 = vadd.f32 %v261, %v273
        %276 = vrot.lane.b32.xlu0 %v223, 8
        %v277 = vpop.permute.xlu0 %276
        %278 = vrot.lane.b32.xlu0 %v224, 8
        %v279 = vpop.permute.xlu0 %278
        %v280 = vsel %vm222, %v277, 0.0
        %v281 = vsel %vm222, %v279, 0.0
        %v282 = vlaneseq
        %v283 = vshrl.u32 %v282, 7
        %v284 = vsub.s32 3, %v283
        %v285 = vrot.slane %v225, %v284
        %v286 = vmul.f32 %v280, %v285
        %v287 = vmul.f32 %v281, %v285
        %v288 = vadd.f32 %v274, %v286
        %v289 = vadd.f32 %v275, %v287
        %290 = vrot.lane.b32.xlu0 %v223, 120
        %v291 = vpop.permute.xlu0 %290
        %292 = vrot.lane.b32.xlu0 %v224, 120
        %v293 = vpop.permute.xlu0 %292
        %v294 = vsel %vm221, %v291, 0.0
        %v295 = vsel %vm221, %v293, 0.0
        %v296 = vlaneseq
        %v297 = vshrl.u32 %v296, 7
        %v298 = vsub.s32 5, %v297
        %v299 = vrot.slane %v225, %v298
        %v300 = vmul.f32 %v294, %v299
        %v301 = vmul.f32 %v295, %v299
        %v302 = vadd.f32 %v288, %v300
        %v303 = vadd.f32 %v289, %v301
        %v304 = vrot.slane %v223, 1
        %v305 = vrot.slane %v224, 1
        %vm306 = vcmp.lt.s32.totalorder %v213, 7
        %v307 = vsel %vm306, %v304, %v305
        %v308 = vsel %vm306, %v305, %v304
        %v309 = vsel %vm217, %v307, 0.0
        %v310 = vsel %vm218, %v308, 0.0
        %311 = vrot.lane.b32.xlu0 %v309, 8
        %v312 = vpop.permute.xlu0 %311
        %313 = vrot.lane.b32.xlu0 %v310, 8
        %v314 = vpop.permute.xlu0 %313
        %v315 = vsel %vm222, %v312, 0.0
        %v316 = vsel %vm222, %v314, 0.0
        %v317 = vlaneseq
        %v318 = vshrl.u32 %v317, 7
        %v319 = vsub.s32 6, %v318
        %v320 = vrot.slane %v225, %v319
        %v321 = vmul.f32 %v315, %v320
        %v322 = vmul.f32 %v316, %v320
        %v323 = vadd.f32 %v302, %v321
        %v324 = vadd.f32 %v303, %v322
        %v325 = vlaneseq
        %v326 = vshrl.u32 %v325, 7
        %v327 = vsub.s32 7, %v326
        %v328 = vrot.slane %v225, %v327
        %v329 = vmul.f32 %v309, %v328
        %v330 = vmul.f32 %v310, %v328
        %v331 = vadd.f32 %v323, %v329
        %v332 = vadd.f32 %v324, %v330
        %333 = vrot.lane.b32.xlu0 %v309, 120
        %v334 = vpop.permute.xlu0 %333
        %335 = vrot.lane.b32.xlu0 %v310, 120
        %v336 = vpop.permute.xlu0 %335
        %v337 = vsel %vm221, %v334, 0.0
        %v338 = vsel %vm221, %v336, 0.0
        %v339 = vlaneseq
        %v340 = vshrl.u32 %v339, 7
        %v341 = vsub.s32 0, %v340
        %v342 = vrot.slane %v226, %v341
        %v343 = vmul.f32 %v337, %v342
        %v344 = vmul.f32 %v338, %v342
        %v345 = vadd.f32 %v331, %v343
        %v346 = vadd.f32 %v332, %v344
        %v347 = vld [vmem:[#allocation7] sm:$0x1]
        %v348 = vadd.f32 %v345, %v346
        %v349 = vrot.slane %v348, 4
        %v350 = vadd.f32 %v348, %v349
        %v351 = vrot.slane %v350, 2
        %v352 = vadd.f32 %v350, %v351
        %v353 = vrot.slane %v352, 1
        %v354 = vadd.f32 %v352, %v353
        %v355 = vadd.f32 %v347, %v354
        %356 = vst [vmem:[#allocation7] sm:$0x1] %v355
        %v357 = vld [vmem:[#allocation8] sm:$0xff]
        %v358 = vld [vmem:[#allocation8 + $0x8] sm:$0xff]
        %v359 = vld [vmem:[#allocation8 + $0x10] sm:$0xff]
        %v360 = vld [vmem:[#allocation8 + $0x18] sm:$0xff]
        %v361 = vld [vmem:[#allocation8 + $0x20] sm:$0xff]
        %v362 = vld [vmem:[#allocation8 + $0x28] sm:$0xff]
        %v363 = vld [vmem:[#allocation8 + $0x30] sm:$0xff]
        %v364 = vld [vmem:[#allocation8 + $0x38] sm:$0xff]
        %v365 = vld [vmem:[#allocation8 + $0x40] sm:$0xff]
        %v366 = vld [vmem:[#allocation8 + $0x48] sm:$0xff]
        %v367 = vld [vmem:[#allocation8 + $0x50] sm:$0xff]
        %v368 = vld [vmem:[#allocation8 + $0x58] sm:$0xff]
        %v369 = vld [vmem:[#allocation8 + $0x60] sm:$0xff]
        %v370 = vld [vmem:[#allocation8 + $0x68] sm:$0xff]
        %v371 = vld [vmem:[#allocation8 + $0x70] sm:$0xff]
        %v372 = vld [vmem:[#allocation8 + $0x78] sm:$0xff]
        %373 = vxpose.xlu0.b32.start [1/16] %v345, 128
        %374 = vxpose.xlu0.b32.cont [2/16] %v346, 128
        %375 = vxpose.xlu0.b32.cont [3/16] 0.0, 128
        %376 = vxpose.xlu0.b32.cont [4/16] 0.0, 128
        %377 = vxpose.xlu0.b32.cont [5/16] 0.0, 128
        %378 = vxpose.xlu0.b32.cont [6/16] 0.0, 128
        %379 = vxpose.xlu0.b32.cont [7/16] 0.0, 128
        %380 = vxpose.xlu0.b32.cont [8/16] 0.0, 128
        %381 = vxpose.xlu0.b32.cont [9/16] 0.0, 128
        %382 = vxpose.xlu0.b32.cont [10/16] 0.0, 128
        %383 = vxpose.xlu0.b32.cont [11/16] 0.0, 128
        %384 = vxpose.xlu0.b32.cont [12/16] 0.0, 128
        %385 = vxpose.xlu0.b32.cont [13/16] 0.0, 128
        %386 = vxpose.xlu0.b32.cont [14/16] 0.0, 128
        %387 = vxpose.xlu0.b32.cont [15/16] 0.0, 128
        %388 = vxpose.xlu0.b32.end [16/16] 0.0, 128
        %v389 = vpop.trf.xlu0
        %v390 = vpop.trf.xlu0
        %v391 = vpop.trf.xlu0
        %v392 = vpop.trf.xlu0
        %v393 = vpop.trf.xlu0
        %v394 = vpop.trf.xlu0
        %v395 = vpop.trf.xlu0
        %v396 = vpop.trf.xlu0
        %v397 = vpop.trf.xlu0
        %v398 = vpop.trf.xlu0
        %v399 = vpop.trf.xlu0
        %v400 = vpop.trf.xlu0
        %v401 = vpop.trf.xlu0
        %v402 = vpop.trf.xlu0
        %v403 = vpop.trf.xlu0
        %v404 = vpop.trf.xlu0
        %vm405 = vcmask 130048
        %v407 = vsel %vm405, %v389, 0
        %v410 = vsel %vm405, %v390, 0
        %v413 = vsel %vm405, %v391, 0
        %v416 = vsel %vm405, %v392, 0
        %v419 = vsel %vm405, %v393, 0
        %v422 = vsel %vm405, %v394, 0
        %v425 = vsel %vm405, %v395, 0
        %v428 = vsel %vm405, %v396, 0
        %v431 = vsel %vm405, %v397, 0
        %v434 = vsel %vm405, %v398, 0
        %v437 = vsel %vm405, %v399, 0
        %v440 = vsel %vm405, %v400, 0
        %v443 = vsel %vm405, %v401, 0
        %v446 = vsel %vm405, %v402, 0
        %v449 = vsel %vm405, %v403, 0
        %v452 = vsel %vm405, %v404, 0
        %454 = vmatprep.subr.mxu0 0.0
        %455 = vmatpush1.msra.mxu0 %v345
        %456 = vmatprep.subr.mxu0 0.0
        %457 = vmatpush1.msra.mxu0 %v346
        %458 = vmatprep.subr.mxu0 0.0
        %459 = vmatpush1.msra.mxu0 0.0
        %460 = vmatprep.subr.mxu0 0.0
        %461 = vmatpush1.msra.mxu0 0.0
        %462 = vmatprep.subr.mxu0 0.0
        %463 = vmatpush1.msra.mxu0 0.0
        %464 = vmatprep.subr.mxu0 0.0
        %465 = vmatpush1.msra.mxu0 0.0
        %466 = vmatprep.subr.mxu0 0.0
        %467 = vmatpush1.msra.mxu0 0.0
        %468 = vmatprep.subr.mxu0 0.0
        %469 = vmatpush1.msra.mxu0 0.0
        %470 = vmatprep.subr.mxu0 0.0
        %471 = vmatpush1.msra.mxu0 0.0
        %472 = vmatprep.subr.mxu0 0.0
        %473 = vmatpush1.msra.mxu0 0.0
        %474 = vmatprep.subr.mxu0 0.0
        %475 = vmatpush1.msra.mxu0 0.0
        %476 = vmatprep.subr.mxu0 0.0
        %477 = vmatpush1.msra.mxu0 0.0
        %478 = vmatprep.subr.mxu0 0.0
        %479 = vmatpush1.msra.mxu0 0.0
        %480 = vmatprep.subr.mxu0 0.0
        %481 = vmatpush1.msra.mxu0 0.0
        %482 = vmatprep.subr.mxu0 0.0
        %483 = vmatpush1.msra.mxu0 0.0
        %484 = vmatprep.subr.mxu0 0.0
        %485 = vmatpush1.msra.mxu0 0.0
        %486 = vmatprep.subr.mxu0 0.0
        %487 = vmatpush1.msra.mxu0 0.0
        %488 = vmatprep.subr.mxu0 0.0
        %489 = vmatpush1.msra.mxu0 0.0
        %490 = vmatprep.subr.mxu0 0.0
        %491 = vmatpush1.msra.mxu0 0.0
        %492 = vmatprep.subr.mxu0 0.0
        %493 = vmatpush1.msra.mxu0 0.0
        %494 = vmatprep.subr.mxu0 0.0
        %495 = vmatpush1.msra.mxu0 0.0
        %496 = vmatprep.subr.mxu0 0.0
        %497 = vmatpush1.msra.mxu0 0.0
        %498 = vmatprep.subr.mxu0 0.0
        %499 = vmatpush1.msra.mxu0 0.0
        %500 = vmatprep.subr.mxu0 0.0
        %501 = vmatpush1.msra.mxu0 0.0
        %502 = vmatprep.subr.mxu0 0.0
        %503 = vmatpush1.msra.mxu0 0.0
        %504 = vmatprep.subr.mxu0 0.0
        %505 = vmatpush1.msra.mxu0 0.0
        %506 = vmatprep.subr.mxu0 0.0
        %507 = vmatpush1.msra.mxu0 0.0
        %508 = vmatprep.subr.mxu0 0.0
        %509 = vmatpush1.msra.mxu0 0.0
        %510 = vmatprep.subr.mxu0 0.0
        %511 = vmatpush1.msra.mxu0 0.0
        %512 = vmatprep.subr.mxu0 0.0
        %513 = vmatpush1.msra.mxu0 0.0
        %514 = vmatprep.subr.mxu0 0.0
        %515 = vmatpush1.msra.mxu0 0.0
        %516 = vmatprep.subr.mxu0 0.0
        %517 = vmatpush1.msra.mxu0 0.0
        %518 = vmatprep.mubr.f32.mxu0 0.0
        %519 = vmatmul.mubr.f32.gmra.mrb[0].mxu0 %v407
        %v520 = vpop.f32.mrb[0].mxu0
        %v521 = vadd.f32 0.0, %v520
        %v522 = vpop.f32.mrb[0].mxu0
        %523 = vmatprep.mubr.f32.mxu0 0.0
        %524 = vmatmul.mubr.f32.gmra.mrb[0].mxu0 %v410
        %v525 = vpop.f32.mrb[0].mxu0
        %v526 = vadd.f32 0.0, %v525
        %v527 = vpop.f32.mrb[0].mxu0
        %528 = vmatprep.mubr.f32.mxu0 0.0
        %529 = vmatmul.mubr.f32.gmra.mrb[0].mxu0 %v413
        %v530 = vpop.f32.mrb[0].mxu0
        %v531 = vadd.f32 0.0, %v530
        %v532 = vpop.f32.mrb[0].mxu0
        %533 = vmatprep.mubr.f32.mxu0 0.0
        %534 = vmatmul.mubr.f32.gmra.mrb[0].mxu0 %v416
        %v535 = vpop.f32.mrb[0].mxu0
        %v536 = vadd.f32 0.0, %v535
        %v537 = vpop.f32.mrb[0].mxu0
        %538 = vmatprep.mubr.f32.mxu0 0.0
        %539 = vmatmul.mubr.f32.gmra.mrb[0].mxu0 %v419
        %v540 = vpop.f32.mrb[0].mxu0
        %v541 = vadd.f32 0.0, %v540
        %v542 = vpop.f32.mrb[0].mxu0
        %543 = vmatprep.mubr.f32.mxu0 0.0
        %544 = vmatmul.mubr.f32.gmra.mrb[0].mxu0 %v422
        %v545 = vpop.f32.mrb[0].mxu0
        %v546 = vadd.f32 0.0, %v545
        %v547 = vpop.f32.mrb[0].mxu0
        %548 = vmatprep.mubr.f32.mxu0 0.0
        %549 = vmatmul.mubr.f32.gmra.mrb[0].mxu0 %v425
        %v550 = vpop.f32.mrb[0].mxu0
        %v551 = vadd.f32 0.0, %v550
        %v552 = vpop.f32.mrb[0].mxu0
        %553 = vmatprep.mubr.f32.mxu0 0.0
        %554 = vmatmul.mubr.f32.gmra.mrb[0].mxu0 %v428
        %v555 = vpop.f32.mrb[0].mxu0
        %v556 = vadd.f32 0.0, %v555
        %v557 = vpop.f32.mrb[0].mxu0
        %558 = vmatprep.mubr.f32.mxu0 0.0
        %559 = vmatmul.mubr.f32.gmra.mrb[0].mxu0 %v431
        %v560 = vpop.f32.mrb[0].mxu0
        %v561 = vadd.f32 0.0, %v560
        %v562 = vpop.f32.mrb[0].mxu0
        %563 = vmatprep.mubr.f32.mxu0 0.0
        %564 = vmatmul.mubr.f32.gmra.mrb[0].mxu0 %v434
        %v565 = vpop.f32.mrb[0].mxu0
        %v566 = vadd.f32 0.0, %v565
        %v567 = vpop.f32.mrb[0].mxu0
        %568 = vmatprep.mubr.f32.mxu0 0.0
        %569 = vmatmul.mubr.f32.gmra.mrb[0].mxu0 %v437
        %v570 = vpop.f32.mrb[0].mxu0
        %v571 = vadd.f32 0.0, %v570
        %v572 = vpop.f32.mrb[0].mxu0
        %573 = vmatprep.mubr.f32.mxu0 0.0
        %574 = vmatmul.mubr.f32.gmra.mrb[0].mxu0 %v440
        %v575 = vpop.f32.mrb[0].mxu0
        %v576 = vadd.f32 0.0, %v575
        %v577 = vpop.f32.mrb[0].mxu0
        %578 = vmatprep.mubr.f32.mxu0 0.0
        %579 = vmatmul.mubr.f32.gmra.mrb[0].mxu0 %v443
        %v580 = vpop.f32.mrb[0].mxu0
        %v581 = vadd.f32 0.0, %v580
        %v582 = vpop.f32.mrb[0].mxu0
        %583 = vmatprep.mubr.f32.mxu0 0.0
        %584 = vmatmul.mubr.f32.gmra.mrb[0].mxu0 %v446
        %v585 = vpop.f32.mrb[0].mxu0
        %v586 = vadd.f32 0.0, %v585
        %v587 = vpop.f32.mrb[0].mxu0
        %588 = vmatprep.mubr.f32.mxu0 0.0
        %589 = vmatmul.mubr.f32.gmra.mrb[0].mxu0 %v449
        %v590 = vpop.f32.mrb[0].mxu0
        %v591 = vadd.f32 0.0, %v590
        %v592 = vpop.f32.mrb[0].mxu0
        %593 = vmatprep.mubr.f32.mxu0 0.0
        %594 = vmatmul.mubr.f32.gmra.mrb[0].mxu0 %v452
        %v595 = vpop.f32.mrb[0].mxu0
        %v596 = vadd.f32 0.0, %v595
        %v597 = vpop.f32.mrb[0].mxu0
        %598 = vdwg.mxu0
        %v599 = vadd.f32 %v357, %v521
        %v600 = vadd.f32 %v358, %v526
        %v601 = vadd.f32 %v359, %v531
        %v602 = vadd.f32 %v360, %v536
        %v603 = vadd.f32 %v361, %v541
        %v604 = vadd.f32 %v362, %v546
        %v605 = vadd.f32 %v363, %v551
        %v606 = vadd.f32 %v364, %v556
        %v607 = vadd.f32 %v365, %v561
        %v608 = vadd.f32 %v366, %v566
        %v609 = vadd.f32 %v367, %v571
        %v610 = vadd.f32 %v368, %v576
        %v611 = vadd.f32 %v369, %v581
        %v612 = vadd.f32 %v370, %v586
        %v613 = vadd.f32 %v371, %v591
        %v614 = vadd.f32 %v372, %v596
        %615 = vst [vmem:[#allocation8] sm:$0xff] %v599
        %616 = vst [vmem:[#allocation8 + $0x8] sm:$0xff] %v600
        %617 = vst [vmem:[#allocation8 + $0x10] sm:$0xff] %v601
        %618 = vst [vmem:[#allocation8 + $0x18] sm:$0xff] %v602
        %619 = vst [vmem:[#allocation8 + $0x20] sm:$0xff] %v603
        %620 = vst [vmem:[#allocation8 + $0x28] sm:$0xff] %v604
        %621 = vst [vmem:[#allocation8 + $0x30] sm:$0xff] %v605
        %622 = vst [vmem:[#allocation8 + $0x38] sm:$0xff] %v606
        %623 = vst [vmem:[#allocation8 + $0x40] sm:$0xff] %v607
        %624 = vst [vmem:[#allocation8 + $0x48] sm:$0xff] %v608
        %625 = vst [vmem:[#allocation8 + $0x50] sm:$0xff] %v609
        %626 = vst [vmem:[#allocation8 + $0x58] sm:$0xff] %v610
        %627 = vst [vmem:[#allocation8 + $0x60] sm:$0xff] %v611
        %628 = vst [vmem:[#allocation8 + $0x68] sm:$0xff] %v612
        %629 = vst [vmem:[#allocation8 + $0x70] sm:$0xff] %v613
        %630 = vst [vmem:[#allocation8 + $0x78] sm:$0xff] %v614
        // Predicated region
        $region41: #{tpu_custom_call.1} parent=27 // pred_check
          %p631 = pneg %p81
        $region42: #{tpu_custom_call.1} parent=27 // pred_check_branch
          %633 = sbr.rel (%p631) target = $region44
        $region43: #{tpu_custom_call.1} parent=27 // pred_region
          %s635 = ssub.s32 16, 16
          %636 = vsyncadd [#allocation4], %s635
          %s638 = sshll.u32 [#allocation7], 4
          %s639 = int_to_ptr.vmem [resolvable:$true] %s638
          %641 = dma.vmem_to_hbm [thread:$0]  %s639, 16, %s2, [#allocation4]
        $region44: #{tpu_custom_call.1} parent=27 // pred_fallthru
          _
        // Predicated region
        $region45: #{tpu_custom_call.1} parent=27 // pred_check
          %p642 = pneg %p102
        $region46: #{tpu_custom_call.1} parent=27 // pred_check_branch
          %644 = sbr.rel (%p642) target = $region48
        $region47: #{tpu_custom_call.1} parent=27 // pred_region
          %s646 = ssub.s32 2048, 2048
          %647 = vsyncadd [#allocation9], %s646
          %s648 = sshll.u32 [#allocation8], 4
          %s649 = int_to_ptr.vmem [resolvable:$true] %s648
          %654 = dma.vmem_to_hbm [thread:$0]  %s649, 2048, %s3, [#allocation9], 128, 128, 8
        $region48: #{tpu_custom_call.1} parent=27 // pred_fallthru
          _
        // Predicated region
        $region49: #{tpu_custom_call.1} parent=27 // pred_check
          %p655 = pneg %p81
        $region50: #{tpu_custom_call.1} parent=27 // pred_check_branch
          %657 = sbr.rel (%p655) target = $region52
        $region51: #{tpu_custom_call.1} parent=27 // pred_region
          %658 = dma.done [#allocation4], 16
        $region52: #{tpu_custom_call.1} parent=27 // pred_fallthru
          _
        // Predicated region
        $region53: #{tpu_custom_call.1} parent=27 // pred_check
          %p659 = pneg %p102
        $region54: #{tpu_custom_call.1} parent=27 // pred_check_branch
          %661 = sbr.rel (%p659) target = $region56
        $region55: #{tpu_custom_call.1} parent=27 // pred_region
          %662 = dma.done [#allocation9], 2048
        $region56: #{tpu_custom_call.1} parent=27 // pred_fallthru
          _
      $region28: #{tpu_custom_call.1} parent=5 // pred_fallthru
        _
      %p663 = scmp.le.s32.totalorder 2, %s16
      // Predicated region
      $region57: #{tpu_custom_call.1} parent=5 // pred_check
        %p664 = pneg %p663
      $region58: #{tpu_custom_call.1} parent=5 // pred_check_branch
        %666 = sbr.rel (%p664) target = $region60
      $region59: #{tpu_custom_call.1} parent=5 // pred_region
        %s667 = ssub.s32 %s16, 2
      $region60: #{tpu_custom_call.1} parent=5 // pred_fallthru
        _
    $region6: #{tpu_custom_call.1} parent=1 // loop_footer
      %s20 = sadd.s32 1, %s16
    $region7: #{tpu_custom_call.1} parent=1 // loop_footer_branch
      %15 = sbr.rel target = $region3
    $region8: #{tpu_custom_call.1} parent=1 // loop_exit
      _
    %668 = vsyncpa [#allocation3], 1
    %s669 = scalar_lea.sflag [#allocation3], 1
    %670 = vsyncpa %s669, 1
    %671 = vsyncpa [#allocation6], 1
    %672 = vsyncpa [#allocation4], 1
    %s673 = scalar_lea.sflag [#allocation4], 1
    %674 = vsyncpa %s673, 1
    %675 = vsyncpa [#allocation9], 1

</llo_original>
